<compile_context>
chip_gen: v7x
topology: tpu7x:2x2x1
jax: 0.10.0
libtpu: 0.0.40
codegen_flags: <defaults>
</compile_context>

<pallas_src>
import math

import jax
import jax.numpy as jnp
from jax import lax
from jax.experimental import pallas as pl
from jax.experimental.pallas import tpu as pltpu


def _make_l1_kernel(*, n_inner, n_blocks, block_rows, chunk_rows, n_chunks,
                    n_rows, cols, needs_mask):
    """Builds the per-block |a-b| partial-sum kernel (statics closed over)."""

    def kernel(exp_ref, gt_ref, out_ref):
        outer = pl.program_id(0)
        inner = pl.program_id(1)

        @pl.when(inner == 0)
        def _init():
            out_ref[...] = jnp.zeros_like(out_ref)

        # Logical (unclamped) first row of this grid step.  The DMA index_map is
        # clamped to the last real block, so overhanging / duplicated rows are
        # zeroed by the mask below and contribute nothing to the sum.
        base_row = (outer * n_inner + inner) * block_rows

        def chunk_body(c, acc):
            r0 = pl.multiple_of(c * chunk_rows, chunk_rows)
            # Cast on load; arithmetic + accumulation stay f32 (safe on v5e
            # which has no bf16 VPU path; DMA, not VPU, is the bottleneck).
            x = exp_ref[pl.ds(r0, chunk_rows), :].astype(jnp.float32)
            y = gt_ref[pl.ds(r0, chunk_rows), :].astype(jnp.float32)
            d = jnp.abs(x - y)
            if needs_mask:
                rows = base_row + r0 + lax.broadcasted_iota(jnp.int32, d.shape, 0)
                d = jnp.where(rows < n_rows, d, 0.0)
            # (chunk_rows, C) -> (chunk_rows//8, 8, C) summed over axis 0 is a
            # pure-VPU tree of vreg adds (no per-step XLU sublane reduce).
            return acc + d.reshape(-1, 8, cols).sum(axis=0)

        acc = lax.fori_loop(0, n_chunks, chunk_body,
                            jnp.zeros((8, cols), jnp.float32))
        # Output block is the VMEM-resident accumulator across the inner axis.
        out_ref[0] += acc

    return kernel


def exp3dmm_loss(exp, video, gt_3dmm, *, exp_weight=1.0, mouth_weight=1.0,
                 rec_weight=1.0, sync_weight=1.0, block_bytes=4 * 1024 * 1024):
    """Pallas equivalent of Exp3DMMLoss.forward.

    exp:      (B, win, 64)
    video:    (B, 3, H, W)   -- unused by the reference forward()
    gt_3dmm:  (B, win, 64)
    returns:  scalar f32 loss = exp_weight * mean(|exp - gt_3dmm|)

    block_bytes ~= VMEM bytes per input per grid step (default 4 MiB; lower it
    only for debugging, raise cautiously -- it is clamped to keep residency
    inside the 32 MiB scoped-VMEM request on all of v5e/v6e/v7x).
    """
    del video, mouth_weight, rec_weight, sync_weight  # unused in forward()
    assert exp.shape == gt_3dmm.shape, (exp.shape, gt_3dmm.shape)
    assert exp.ndim >= 2
    n_elem = int(math.prod(exp.shape))
    cols = int(exp.shape[-1])

    # Native layout: merge leading dims only (free bitcast, no relayout / pad
    # copy of the inputs -- the minor dimension is untouched).
    exp2d = exp.reshape(-1, cols)
    gt2d = gt_3dmm.reshape(-1, cols)
    n_rows = int(exp2d.shape[0])

    itemsize = int(jnp.dtype(exp.dtype).itemsize)
    sub = max(8, 32 // itemsize)              # min sublane multiple per dtype
    padded_cols = 128 * pl.cdiv(cols, 128)    # VMEM lane padding for budgeting

    # Block rows sized from the *VMEM* footprint (lane-padded), clamped so
    # 2 inputs x 2 pipeline buffers + chunk temporaries stay well inside the
    # 32 MiB scoped-VMEM limit requested below.
    block_bytes = int(min(max(int(block_bytes), sub * padded_cols * itemsize),
                          6 * 1024 * 1024))
    rows_cap = sub * pl.cdiv(n_rows, sub)
    block_rows = max(sub, min(
        sub * pl.cdiv(block_bytes // (padded_cols * itemsize), sub), rows_cap))
    # In-kernel chunking bounds elementwise temporaries to <=1024 rows so VMEM
    # residency is dominated by the double-buffered input blocks.
    chunk_rows = min(block_rows, 1024)
    if block_rows > chunk_rows:
        block_rows = chunk_rows * (block_rows // chunk_rows)
    n_chunks = block_rows // chunk_rows

    n_blocks = pl.cdiv(n_rows, block_rows)
    # 2-way outer split so v7x's two TensorCores can each stream half the rows
    # (the "parallel" axis); harmless on 1-TC v5e/v6e -- at most one duplicated
    # block, which the mask zeroes out.
    n_outer = 2 if n_blocks >= 2 else 1
    n_inner = pl.cdiv(n_blocks, n_outer)
    needs_mask = (n_outer * n_inner * block_rows) != n_rows

    kernel = _make_l1_kernel(n_inner=n_inner, n_blocks=n_blocks,
                             block_rows=block_rows, chunk_rows=chunk_rows,
                             n_chunks=n_chunks, n_rows=n_rows, cols=cols,
                             needs_mask=needs_mask)

    def in_index_map(o, i, _ni=n_inner, _nb=n_blocks):
        # Clamp so every DMA window starts inside the array; overhanging /
        # duplicated logical blocks are neutralized by the in-kernel row mask.
        return (jnp.minimum(o * _ni + i, _nb - 1), 0)

    partials = pl.pallas_call(
        kernel,
        out_shape=jax.ShapeDtypeStruct((n_outer, 8, cols), jnp.float32),
        grid=(n_outer, n_inner),
        in_specs=[
            pl.BlockSpec((block_rows, cols), in_index_map),
            pl.BlockSpec((block_rows, cols), in_index_map),
        ],
        out_specs=pl.BlockSpec((1, 8, cols), lambda o, i: (o, 0, 0)),
        compiler_params=pltpu.CompilerParams(
            dimension_semantics=("parallel", "arbitrary"),
            vmem_limit_bytes=32 * 1024 * 1024),
        cost_estimate=pl.CostEstimate(
            flops=3 * n_elem,
            transcendentals=0,
            bytes_accessed=2 * n_elem * itemsize + n_outer * 8 * cols * 4),
    )(exp2d, gt2d)

    # Final (n_outer, 8, C) -> scalar reduce + mean scaling: a tiny op XLA fuses
    # with whatever consumes the loss.
    scale = jnp.float32(float(exp_weight) / float(n_elem))
    return scale * jnp.sum(partials)


if __name__ == "__main__":
    key = jax.random.PRNGKey(0)
    k1, k2, k3, k4, k5 = jax.random.split(key, 5)

    # Shapes implied by the module: exp/gt_3dmm (B, win, 64), video (B, 3, H, W).
    B, win, C = 2, 8, 64
    H = W = 16

    exp = jax.random.normal(k1, (B, win, C), dtype=jnp.float32)
    gt_3dmm = jax.random.normal(k2, (B, win, C), dtype=jnp.float32)
    video = jax.random.normal(k3, (B, 3, H, W), dtype=jnp.float32)  # unused

    exp_weight = 2.0
    loss = exp3dmm_loss(exp, video, gt_3dmm, exp_weight=exp_weight)
    loss = jax.block_until_ready(loss)
    ref = exp_weight * jnp.mean(jnp.abs(exp - gt_3dmm))
    assert jnp.allclose(loss, ref, rtol=1e-5, atol=1e-5), (loss, ref)

    # Second check: ragged row/col counts + tiny blocks.  Exercises the 2D
    # (parallel, arbitrary) grid, the clamped index_map and the in-kernel tail
    # mask (no wrapper-side padding anywhere).
    exp2 = jax.random.normal(k4, (4, 16, C), dtype=jnp.float32)[:, :15, :61]
    gt2 = jax.random.normal(k5, (4, 16, C), dtype=jnp.float32)[:, :15, :61]
    loss2 = exp3dmm_loss(exp2, video, gt2, exp_weight=0.5,
                         block_bytes=8 * 128 * 4)
    loss2 = jax.block_until_ready(loss2)
    ref2 = 0.5 * jnp.mean(jnp.abs(exp2 - gt2))
    assert jnp.allclose(loss2, ref2, rtol=1e-5, atol=1e-5), (loss2, ref2)

    print("KERNEL_OK")
</pallas_src>

<mosaic_0001>
module attributes {stable_mosaic.version = 11 : i64} {
  func.func @kernel(%arg0: i32, %arg1: i32, %arg2: memref<16x64xf32, #tpu.memory_space<vmem>>, %arg3: memref<16x64xf32, #tpu.memory_space<vmem>>, %arg4: memref<1x8x64xf32, #tpu.memory_space<vmem>>) attributes {dimension_semantics = [#tpu.dimension_semantics<parallel>, #tpu.dimension_semantics<arbitrary>], iteration_bounds = array<i64: 1, 1>, scalar_prefetch = 0 : i64, scratch_operands = 0 : i64, tpu.core_type = #tpu.core_type<tc>, window_params = [{transform_indices = @transform_0, window_bounds = array<i64: 16, 64>}, {transform_indices = @transform_1, window_bounds = array<i64: 16, 64>}, {transform_indices = @transform_2, window_bounds = array<i64: 1, 8, 64>}]} {
    %c0_i32 = arith.constant 0 : i32
    %0 = arith.cmpi eq, %arg1, %c0_i32 : i32
    %1 = arith.extui %0 : i1 to i32
    %c0_i32_0 = arith.constant 0 : i32
    %2 = arith.cmpi ne, %1, %c0_i32_0 : i32
    scf.if %2 {
      %cst_10 = arith.constant 0.000000e+00 : f32
      %21 = vector.broadcast %cst_10 : f32 to vector<1x8x64xf32>
      %c0_11 = arith.constant 0 : index
      %c0_12 = arith.constant 0 : index
      %c0_13 = arith.constant 0 : index
      %22 = vector.load %arg4[%c0_11, %c0_12, %c0_13] : memref<1x8x64xf32, #tpu.memory_space<vmem>>, vector<1x8x64xf32>
      tpu.vector_store %arg4[%c0_11, %c0_12, %c0_13], %21 {strides = array<i32>} : memref<1x8x64xf32, #tpu.memory_space<vmem>>, vector<1x8x64xf32>,
    } else {
    }
    %cst = arith.constant 0.000000e+00 : f32
    %3 = vector.broadcast %cst : f32 to vector<8x64xf32>
    %c0_i32_1 = arith.constant 0 : i32
    %c16_i32 = arith.constant 16 : i32
    %4 = arith.muli %c0_i32_1, %c16_i32 : i32
    %5 = tpu.assume_multiple %4, 16 : i32
    %6 = arith.index_cast %5 : i32 to index
    %c0 = arith.constant 0 : index
    %7 = vector.load %arg2[%6, %c0] : memref<16x64xf32, #tpu.memory_space<vmem>>, vector<16x64xf32>
    %8 = arith.index_cast %5 : i32 to index
    %c0_2 = arith.constant 0 : index
    %9 = vector.load %arg3[%8, %c0_2] : memref<16x64xf32, #tpu.memory_space<vmem>>, vector<16x64xf32>
    %10 = arith.subf %7, %9 : vector<16x64xf32>
    %11 = math.absf %10 : vector<16x64xf32>
    %12 = vector.shape_cast %11 : vector<16x64xf32> to vector<2x8x64xf32>
    %cst_3 = arith.constant dense<0.000000e+00> : vector<8x64xf32>
    %13 = vector.multi_reduction <add>, %12, %cst_3 [0] : vector<2x8x64xf32> to vector<8x64xf32>
    %14 = arith.addf %3, %13 : vector<8x64xf32>
    %c1_i32 = arith.constant 1 : i32
    %c0_4 = arith.constant 0 : index
    %c0_5 = arith.constant 0 : index
    %c0_6 = arith.constant 0 : index
    %15 = vector.load %arg4[%c0_4, %c0_5, %c0_6] : memref<1x8x64xf32, #tpu.memory_space<vmem>>, vector<1x8x64xf32>
    %16 = vector.shape_cast %15 : vector<1x8x64xf32> to vector<8x64xf32>
    %17 = arith.addf %16, %14 : vector<8x64xf32>
    %c0_7 = arith.constant 0 : index
    %c0_8 = arith.constant 0 : index
    %c0_9 = arith.constant 0 : index
    %18 = vector.load %arg4[%c0_7, %c0_8, %c0_9] : memref<1x8x64xf32, #tpu.memory_space<vmem>>, vector<1x8x64xf32>
    %19 = vector.shape_cast %18 : vector<1x8x64xf32> to vector<8x64xf32>
    %20 = vector.shape_cast %17 : vector<8x64xf32> to vector<1x8x64xf32>
    tpu.vector_store %arg4[%c0_7, %c0_8, %c0_9], %20 {strides = array<i32>} : memref<1x8x64xf32, #tpu.memory_space<vmem>>, vector<1x8x64xf32>,
    return
  }
  func.func @transform_0(%arg0: i32, %arg1: i32) -> (i32, i32) {
    %c1_i32 = arith.constant 1 : i32
    %0 = arith.muli %arg0, %c1_i32 : i32
    %1 = arith.addi %0, %arg1 : i32
    %c0_i32 = arith.constant 0 : i32
    %2 = arith.minsi %1, %c0_i32 : i32
    %c0_i32_0 = arith.constant 0 : i32
    %c0_i32_1 = arith.constant 0 : i32
    return %2, %c0_i32_0 : i32, i32
  }
  func.func @transform_1(%arg0: i32, %arg1: i32) -> (i32, i32) {
    %c1_i32 = arith.constant 1 : i32
    %0 = arith.muli %arg0, %c1_i32 : i32
    %1 = arith.addi %0, %arg1 : i32
    %c0_i32 = arith.constant 0 : i32
    %2 = arith.minsi %1, %c0_i32 : i32
    %c0_i32_0 = arith.constant 0 : i32
    %c0_i32_1 = arith.constant 0 : i32
    return %2, %c0_i32_0 : i32, i32
  }
  func.func @transform_2(%arg0: i32, %arg1: i32) -> (i32, i32, i32) {
    %c0_i32 = arith.constant 0 : i32
    %c0_i32_0 = arith.constant 0 : i32
    %c0_i32_1 = arith.constant 0 : i32
    return %arg0, %c0_i32, %c0_i32_0 : i32, i32, i32
  }
}

</mosaic_0001>

<llo_original>
// kernel: tpu_custom_call.1
$region0: #{tpu_custom_call.1}
  #allocation0 [shape = 'u32[]', space=smem, size = 0x4, offset = 0x4, fixed_abs, tag = 'smem constant byte address 0x4 - core index']
  #allocation1 [shape = 'u32[144,128]{1,0:T(1,128)}', space=vmem, size = 0x12000, scoped, tag = 'internal scratch']
  %s0 = inlined_call_operand.hbm [shape: f32[16,64], index: 0, kind: input, shape index: {}]
  %s1 = inlined_call_operand.hbm [shape: f32[16,64], index: 1, kind: input, shape index: {}]
  %s2 = inlined_call_operand.hbm [shape: f32[1,8,64], index: 2, kind: output, shape index: {}]
  %s3 = sld [smem:[#allocation0]]
  $region30: #{tpu_custom_call.1} parent=0
    _
  %s5 = ssub.s32 1, %s3
  %s6 = scalar_select 0, %s5, %s3
  $region1: #{tpu_custom_call.1} parent=0
    #allocation2 [shape = 'u8[8192]{0}', space=vmem, size = 0x2000, scoped, tag = 'input window, operand 0, single buffered']
    #allocation3 [shape = 's32[1]{0}', space=sflag, size = 0x4, scoped, tag = 'scoped memory for tpu_custom_call.1']
    #allocation4 [shape = 's32[1]{0}', space=sflag, size = 0x4, scoped, tag = 'scoped memory for tpu_custom_call.1']
    #allocation5 [shape = 'u8[8192]{0}', space=vmem, size = 0x2000, scoped, tag = 'input window, operand 1, single buffered']
    #allocation6 [shape = 's32[1]{0}', space=sflag, size = 0x4, scoped, tag = 'scoped memory for tpu_custom_call.1']
    #allocation7 [shape = 'u8[4096]{0}', space=vmem, size = 0x1000, scoped, tag = 'output window, operand 0, single buffered']
    %7 = vsyncpa [#allocation3], 0
    %8 = vsyncpa [#allocation6], 0
    %9 = vsyncpa [#allocation4], 0
    // Predicated region
    $region2: #{tpu_custom_call.1} parent=1 // pred_check
      _
    $region3: #{tpu_custom_call.1} parent=1 // pred_check_branch
      %11 = sbr.rel (0) target = $region5
    $region4: #{tpu_custom_call.1} parent=1 // pred_region
      %s12 = sadd.s32 0, 0
      %p13 = scmp.lt.s32.totalorder %s12, 0
      %s14 = scalar_select %p13, %s12, 0
      %s15 = smul.u32 2, %s14
      %s17 = ssub.s32 256, 256
      %18 = vsyncadd [#allocation3], %s17
      %s19 = smul.addr %s15, 128
      %s20 = scalar_lea.hbm %s0, %s19
      %s21 = sshll.u32 [#allocation2], 4
      %s22 = int_to_ptr.vmem [resolvable:$true] %s21
      %27 = dma.hbm_to_vmem [thread:$0]  %s20, 256, %s22, [#allocation3], 128, 128, 8
    $region5: #{tpu_custom_call.1} parent=1 // pred_fallthru
      _
    // Predicated region
    $region6: #{tpu_custom_call.1} parent=1 // pred_check
      _
    $region7: #{tpu_custom_call.1} parent=1 // pred_check_branch
      %29 = sbr.rel (0) target = $region9
    $region8: #{tpu_custom_call.1} parent=1 // pred_region
      %s30 = sadd.s32 0, 0
      %p31 = scmp.lt.s32.totalorder %s30, 0
      %s32 = scalar_select %p31, %s30, 0
      %s33 = smul.u32 2, %s32
      %s35 = ssub.s32 256, 256
      %36 = vsyncadd [#allocation6], %s35
      %s37 = smul.addr %s33, 128
      %s38 = scalar_lea.hbm %s1, %s37
      %s39 = sshll.u32 [#allocation5], 4
      %s40 = int_to_ptr.vmem [resolvable:$true] %s39
      %45 = dma.hbm_to_vmem [thread:$0]  %s38, 256, %s40, [#allocation6], 128, 128, 8
    $region9: #{tpu_custom_call.1} parent=1 // pred_fallthru
      _
    // Predicated region
    $region10: #{tpu_custom_call.1} parent=1 // pred_check
      _
    $region11: #{tpu_custom_call.1} parent=1 // pred_check_branch
      %47 = sbr.rel (0) target = $region13
    $region12: #{tpu_custom_call.1} parent=1 // pred_region
      %48 = dma.done [#allocation3], 256
    $region13: #{tpu_custom_call.1} parent=1 // pred_fallthru
      _
    // Predicated region
    $region14: #{tpu_custom_call.1} parent=1 // pred_check
      _
    $region15: #{tpu_custom_call.1} parent=1 // pred_check_branch
      %50 = sbr.rel (0) target = $region17
    $region16: #{tpu_custom_call.1} parent=1 // pred_region
      %51 = dma.done [#allocation6], 256
    $region17: #{tpu_custom_call.1} parent=1 // pred_fallthru
      _
    %s52 = sadd.s32 0, 0
    %p53 = scmp.lt.s32.totalorder %s52, 0
    %s54 = scalar_select %p53, %s52, 0
    %s55 = smul.u32 2, %s54
    %s56 = sadd.s32 0, 0
    %p57 = scmp.lt.s32.totalorder %s56, 0
    %s58 = scalar_select %p57, %s56, 0
    %s59 = smul.u32 2, %s58
    %p60 = scmp.eq.s32.totalorder 0, 0
    // Predicated region
    $region18: #{tpu_custom_call.1} parent=1 // pred_check
      %p61 = pneg %p60
    $region19: #{tpu_custom_call.1} parent=1 // pred_check_branch
      %63 = sbr.rel (%p61) target = $region21
    $region20: #{tpu_custom_call.1} parent=1 // pred_region
      %vm64 = vcmask 523264
      %65 = vst.msk [vmem:[#allocation7] sm:$0xff] %vm64, 0.0
    $region21: #{tpu_custom_call.1} parent=1 // pred_fallthru
      _
    %v66 = vld [vmem:[#allocation2] sm:$0xff]
    %v67 = vld [vmem:[#allocation2 + $0x8] sm:$0xff]
    %v68 = vld [vmem:[#allocation5] sm:$0xff]
    %v69 = vld [vmem:[#allocation5 + $0x8] sm:$0xff]
    %v70 = vsub.f32 %v66, %v68
    %v71 = vsub.f32 %v67, %v69
    %v72 = vand.u32 2147483647, %v70
    %v73 = vand.u32 2147483647, %v71
    %vm74 = vcmask 523264
    %v75 = vsel %vm74, %v72, 0.0
    %v76 = vsel %vm74, %v73, 0.0
    %v77 = vadd.f32 %v75, %v76
    %v78 = vadd.f32 %v77, 0.0
    %v79 = vld [vmem:[#allocation7] sm:$0xff]
    %v80 = vadd.f32 %v79, %v78
    %81 = vst.msk [vmem:[#allocation7] sm:$0xff] %vm74, %v80
    // Predicated region
    $region22: #{tpu_custom_call.1} parent=1 // pred_check
      _
    $region23: #{tpu_custom_call.1} parent=1 // pred_check_branch
      %83 = sbr.rel (0) target = $region25
    $region24: #{tpu_custom_call.1} parent=1 // pred_region
      %s85 = ssub.s32 128, 128
      %86 = vsyncadd [#allocation4], %s85
      %s88 = sshll.u32 [#allocation7], 4
      %s89 = int_to_ptr.vmem [resolvable:$true] %s88
      %91 = dma.vmem_to_hbm [thread:$0]  %s89, 128, %s2, [#allocation4]
    $region25: #{tpu_custom_call.1} parent=1 // pred_fallthru
      _
    // Predicated region
    $region26: #{tpu_custom_call.1} parent=1 // pred_check
      _
    $region27: #{tpu_custom_call.1} parent=1 // pred_check_branch
      %93 = sbr.rel (0) target = $region29
    $region28: #{tpu_custom_call.1} parent=1 // pred_region
      %94 = dma.done [#allocation4], 128
    $region29: #{tpu_custom_call.1} parent=1 // pred_fallthru
      _
    %95 = vsyncpa [#allocation3], 1
    %96 = vsyncpa [#allocation6], 1
    %97 = vsyncpa [#allocation4], 1

</llo_original>
